<compile_context>
chip_gen: v7x
topology: tpu7x:2x2x1
jax: 0.10.0
libtpu: 0.0.40
codegen_flags: <defaults>
</compile_context>

<pallas_src>
import jax
import jax.numpy as jnp
import numpy as np
from jax import lax
from jax.experimental import pallas as pl
from jax.experimental.pallas import tpu as pltpu


def _round_up(x, m):
    return (x + m - 1) // m * m


def _vmem_limit_bytes():
    """Generation-aware VMEM budget: ~75% of physical VMEM, capped at 100 MiB."""
    try:
        info = pltpu.get_tpu_info()
        cap = getattr(info, "vmem_capacity_bytes", None)
        if cap:
            return int(min(cap * 3 // 4, 100 * 1024 * 1024))
    except Exception:
        pass
    return 48 * 1024 * 1024


def _pick_row_tile(m, tile_m=512):
    """Row tile: multiple of 16 (bf16 sublane pack), <= tile_m, and sized so the
    grid has >= 2 tiles whenever M allows (v7x has 2 TensorCores per chip)."""
    if m <= 16:
        return m
    return min(tile_m, _round_up(pl.cdiv(m, 2), 16), _round_up(m, 16))


# ---------------------------------------------------------------------------
# Kernel A: y1 = relu(A1 @ W1 + b1)  (conv1 + folded BN + ReLU)
# ---------------------------------------------------------------------------
def _conv_bn_relu_kernel(a_ref, w_ref, b_ref, o_ref):
    acc = jnp.dot(a_ref[...], w_ref[...], preferred_element_type=jnp.float32)
    acc = jnp.maximum(acc + b_ref[...], 0.0)          # (1, C) bias broadcasts
    o_ref[...] = acc.astype(o_ref.dtype)


def conv_bn_relu(a, w, b, out_width, *, tile_m=512):
    """a: (M, Kpad) bf16, w: (Kpad, out_width) bf16, b: (1, out_width) f32."""
    m, k = a.shape
    tm = _pick_row_tile(m, tile_m)
    return pl.pallas_call(
        _conv_bn_relu_kernel,
        out_shape=jax.ShapeDtypeStruct((m, out_width), jnp.bfloat16),
        grid_spec=pltpu.PrefetchScalarGridSpec(
            num_scalar_prefetch=0,
            grid=(pl.cdiv(m, tm),),
            in_specs=[
                pl.BlockSpec((tm, k), lambda i: (i, 0)),          # row tile of A
                pl.BlockSpec((k, out_width), lambda i: (0, 0)),   # resident weight
                pl.BlockSpec((1, out_width), lambda i: (0, 0)),   # resident bias
            ],
            out_specs=pl.BlockSpec((tm, out_width), lambda i: (i, 0)),
        ),
        compiler_params=pltpu.CompilerParams(
            dimension_semantics=("parallel",),
            vmem_limit_bytes=_vmem_limit_bytes(),
        ),
    )(a, w, b)


# ---------------------------------------------------------------------------
# Kernel B: fused conv2+BN+ReLU -> deconv (y2 stays in VMEM, never hits HBM)
#   y2 = relu(A2 @ W2 + b2)   (f32 accum, cast bf16)
#   y3 = y2 @ W3 + b3         (f32 accum, stored bf16)
# ---------------------------------------------------------------------------
def _conv_bn_relu_deconv_kernel(a_ref, w2_ref, b2_ref, w3_ref, b3_ref, o_ref):
    y2 = jnp.dot(a_ref[...], w2_ref[...], preferred_element_type=jnp.float32)
    y2 = jnp.maximum(y2 + b2_ref[...], 0.0).astype(jnp.bfloat16)
    y3 = jnp.dot(y2, w3_ref[...], preferred_element_type=jnp.float32)
    o_ref[...] = (y3 + b3_ref[...]).astype(o_ref.dtype)


def conv_bn_relu_deconv(a, w2, b2, w3, b3, *, tile_m=512):
    """a: (M, K2pad) bf16; w2: (K2pad, Cmid) bf16; w3: (Cmid, P3) bf16;
    b2: (1, Cmid) f32; b3: (1, P3) f32.  Returns (M, P3) bf16."""
    m, k2 = a.shape
    cmid = w2.shape[1]
    p3 = w3.shape[1]
    tm = _pick_row_tile(m, tile_m)
    return pl.pallas_call(
        _conv_bn_relu_deconv_kernel,
        out_shape=jax.ShapeDtypeStruct((m, p3), jnp.bfloat16),
        grid_spec=pltpu.PrefetchScalarGridSpec(
            num_scalar_prefetch=0,
            grid=(pl.cdiv(m, tm),),
            in_specs=[
                pl.BlockSpec((tm, k2), lambda i: (i, 0)),      # row tile of A2
                pl.BlockSpec((k2, cmid), lambda i: (0, 0)),    # resident conv2 W
                pl.BlockSpec((1, cmid), lambda i: (0, 0)),     # resident conv2 b
                pl.BlockSpec((cmid, p3), lambda i: (0, 0)),    # resident deconv W
                pl.BlockSpec((1, p3), lambda i: (0, 0)),       # resident deconv b
            ],
            out_specs=pl.BlockSpec((tm, p3), lambda i: (i, 0)),
        ),
        compiler_params=pltpu.CompilerParams(
            dimension_semantics=("parallel",),
            vmem_limit_bytes=_vmem_limit_bytes(),
        ),
    )(a, w2, b2, w3, b3)


# ---------------------------------------------------------------------------
# Wrapper-side layout / parameter preparation (tiny, one-time passes).
# ---------------------------------------------------------------------------
def _im2col_3x3_valid(x_nhwc, k_pad):
    """(N, H, W, C) -> (N*(H-2)*(W-2), k_pad); tap order (dy, dx, c), K zero-padded."""
    n, h, w, c = x_nhwc.shape
    ho, wo = h - 2, w - 2
    cols = [x_nhwc[:, dy:dy + ho, dx:dx + wo, :]
            for dy in range(3) for dx in range(3)]
    a = jnp.concatenate(cols, axis=-1).reshape(n * ho * wo, 9 * c)
    if k_pad > 9 * c:
        a = jnp.pad(a, ((0, 0), (0, k_pad - 9 * c)))
    return a


def _fold_bn(w_oihw, b, gamma, beta, mean, var, eps):
    s = gamma / jnp.sqrt(var + eps)
    return w_oihw * s[:, None, None, None], (b - mean) * s + beta


def _conv_weight_matrix(w_oihw, cin_store, k_pad, cout_store):
    """(Cout, Cin, 3, 3) -> (k_pad, cout_store), rows ordered (dy, dx, cin)."""
    cout, cin, kh, kw = w_oihw.shape
    w = jnp.pad(w_oihw, ((0, cout_store - cout), (0, cin_store - cin),
                         (0, 0), (0, 0)))
    w = jnp.transpose(w, (2, 3, 1, 0)).reshape(kh * kw * cin_store, cout_store)
    return jnp.pad(w, ((0, k_pad - kh * kw * cin_store), (0, 0)))


def _deconv_weight_matrix(w_iokk, cin_pad, ncols_pad):
    """(Cin, Cout, 2, 2) -> (cin_pad, ncols_pad), columns ordered (dy, dx, cout)."""
    cin, cout, kh, kw = w_iokk.shape
    w = jnp.transpose(w_iokk, (0, 2, 3, 1)).reshape(cin, kh * kw * cout)
    return jnp.pad(w, ((0, cin_pad - cin), (0, ncols_pad - kh * kw * cout)))


# ---------------------------------------------------------------------------
# _DecoderBlock forward.
# ---------------------------------------------------------------------------
def decoder_block_forward(x_nchw, params, eps=1e-5):
    """x: (N, Cin, H, W) f32 -> (N, Cout, 2*(H-4), 2*(W-4)) f32."""
    n, cin, h, w = x_nchw.shape
    cm = params["w1"].shape[0]
    cout = params["w3"].shape[1]
    ho1, wo1 = h - 2, w - 2
    ho2, wo2 = h - 4, w - 4

    # Compact intermediate width: only pad channels to 128 when cm is already
    # lane-sized (avoids 16x inflated HBM traffic for small cm).
    cm_store = cm if cm < 128 else _round_up(cm, 128)
    cm_mid = _round_up(cm, 128)           # VMEM-only width inside fused kernel
    k1 = _round_up(9 * cin, 128)
    k2 = _round_up(9 * cm_store, 128)
    p3 = _round_up(4 * cout, 128)

    # TODO(synk): training-mode BatchNorm (batch statistics) not implemented;
    # inference-mode running stats are folded into the conv weights/biases.
    w1f, b1f = _fold_bn(params["w1"], params["b1"], params["g1"], params["beta1"],
                        params["rm1"], params["rv1"], eps)
    w2f, b2f = _fold_bn(params["w2"], params["b2"], params["g2"], params["beta2"],
                        params["rm2"], params["rv2"], eps)

    w1m = _conv_weight_matrix(w1f, cin, k1, cm_store).astype(jnp.bfloat16)
    w2m = _conv_weight_matrix(w2f, cm_store, k2, cm_mid).astype(jnp.bfloat16)
    w3m = _deconv_weight_matrix(params["w3"], cm_mid, p3).astype(jnp.bfloat16)

    b1v = jnp.pad(b1f, (0, cm_store - cm)).reshape(1, cm_store).astype(jnp.float32)
    b2v = jnp.pad(b2f, (0, cm_mid - cm)).reshape(1, cm_mid).astype(jnp.float32)
    b3v = jnp.pad(jnp.tile(params["b3"], 4),
                  (0, p3 - 4 * cout)).reshape(1, p3).astype(jnp.float32)

    # layer 1: conv3x3(valid) + BN + ReLU  (single fused matmul, K = 9*Cin padded)
    x_nhwc = jnp.transpose(x_nchw, (0, 2, 3, 1)).astype(jnp.bfloat16)
    a1 = _im2col_3x3_valid(x_nhwc, k1)                     # (N*ho1*wo1, k1)
    y1 = conv_bn_relu(a1, w1m, b1v, cm_store)              # (N*ho1*wo1, cm_store)

    # layers 2+3 fused: conv3x3(valid)+BN+ReLU feeding ConvTranspose2d(k=2, s=2)
    a2 = _im2col_3x3_valid(y1.reshape(n, ho1, wo1, cm_store), k2)
    y3 = conv_bn_relu_deconv(a2, w2m, b2v, w3m, b3v)       # (N*ho2*wo2, p3) bf16

    # pixel-shuffle: each input pixel expands to a (2,2,Cout) output block
    y3 = y3[:, :4 * cout].reshape(n, ho2, wo2, 2, 2, cout)
    y3 = y3.transpose(0, 1, 3, 2, 4, 5).reshape(n, 2 * ho2, 2 * wo2, cout)
    return jnp.transpose(y3, (0, 3, 1, 2)).astype(jnp.float32)   # NCHW f32


# ---------------------------------------------------------------------------
# Pure-JAX reference (same inference-mode BN / bf16-operand numerics).
# ---------------------------------------------------------------------------
def decoder_block_reference(x_nchw, params, eps=1e-5):
    w1f, b1f = _fold_bn(params["w1"], params["b1"], params["g1"], params["beta1"],
                        params["rm1"], params["rv1"], eps)
    w2f, b2f = _fold_bn(params["w2"], params["b2"], params["g2"], params["beta2"],
                        params["rm2"], params["rv2"], eps)

    y = x_nchw.astype(jnp.bfloat16)
    y = lax.conv_general_dilated(y, w1f.astype(jnp.bfloat16), (1, 1), "VALID",
                                 dimension_numbers=("NCHW", "OIHW", "NCHW"),
                                 preferred_element_type=jnp.float32)
    y = jnp.maximum(y + b1f[None, :, None, None], 0.0).astype(jnp.bfloat16)
    y = lax.conv_general_dilated(y, w2f.astype(jnp.bfloat16), (1, 1), "VALID",
                                 dimension_numbers=("NCHW", "OIHW", "NCHW"),
                                 preferred_element_type=jnp.float32)
    y = jnp.maximum(y + b2f[None, :, None, None], 0.0).astype(jnp.bfloat16)

    # ConvTranspose2d(k=2, s=2): out[n,co,2i+dy,2j+dx] = sum_ci x[n,ci,i,j]*w[ci,co,dy,dx]
    z = jnp.einsum("nchw,cokl->nhwklo", y, params["w3"].astype(jnp.bfloat16),
                   preferred_element_type=jnp.float32)
    n, h2, w2 = z.shape[0], z.shape[1], z.shape[2]
    cout = params["w3"].shape[1]
    z = z.transpose(0, 5, 1, 3, 2, 4).reshape(n, cout, 2 * h2, 2 * w2)
    return z + params["b3"][None, :, None, None]


if __name__ == "__main__":
    key = jax.random.PRNGKey(0)
    ks = jax.random.split(key, 16)

    n, cin, cm, cout, h, w = 2, 4, 8, 4, 16, 16

    def uinit(k, shape, fan_in):
        bound = 1.0 / np.sqrt(fan_in)
        return jax.random.uniform(k, shape, minval=-bound, maxval=bound,
                                  dtype=jnp.float32)

    x = jax.random.normal(ks[0], (n, cin, h, w), dtype=jnp.float32)
    params = dict(
        # Conv2d(cin, cm, 3) + BatchNorm2d(cm)
        w1=uinit(ks[1], (cm, cin, 3, 3), cin * 9),
        b1=uinit(ks[2], (cm,), cin * 9),
        g1=jax.random.uniform(ks[3], (cm,), minval=0.5, maxval=1.5, dtype=jnp.float32),
        beta1=0.1 * jax.random.normal(ks[4], (cm,), dtype=jnp.float32),
        rm1=0.1 * jax.random.normal(ks[5], (cm,), dtype=jnp.float32),
        rv1=jax.random.uniform(ks[6], (cm,), minval=0.5, maxval=1.5, dtype=jnp.float32),
        # Conv2d(cm, cm, 3) + BatchNorm2d(cm)
        w2=uinit(ks[7], (cm, cm, 3, 3), cm * 9),
        b2=uinit(ks[8], (cm,), cm * 9),
        g2=jax.random.uniform(ks[9], (cm,), minval=0.5, maxval=1.5, dtype=jnp.float32),
        beta2=0.1 * jax.random.normal(ks[10], (cm,), dtype=jnp.float32),
        rm2=0.1 * jax.random.normal(ks[11], (cm,), dtype=jnp.float32),
        rv2=jax.random.uniform(ks[12], (cm,), minval=0.5, maxval=1.5, dtype=jnp.float32),
        # ConvTranspose2d(cm, cout, 2, stride=2); weight layout (in, out, kH, kW)
        w3=uinit(ks[13], (cm, cout, 2, 2), cm * 4),
        b3=uinit(ks[14], (cout,), cm * 4),
    )

    out = jax.block_until_ready(decoder_block_forward(x, params))
    ref = jax.block_until_ready(decoder_block_reference(x, params))

    assert out.shape == (n, cout, 2 * (h - 4), 2 * (w - 4)), out.shape
    np.testing.assert_allclose(np.asarray(out), np.asarray(ref),
                               rtol=2e-2, atol=2e-2)

    print("KERNEL_OK")
</pallas_src>

<mosaic_0001>
module attributes {stable_mosaic.version = 11 : i64} {
  func.func @_conv_bn_relu_kernel(%arg0: i32, %arg1: memref<208x128xbf16, #tpu.memory_space<vmem>>, %arg2: memref<128x8xbf16, #tpu.memory_space<vmem>>, %arg3: memref<1x8xf32, #tpu.memory_space<vmem>>, %arg4: memref<208x8xbf16, #tpu.memory_space<vmem>>) attributes {dimension_semantics = [#tpu.dimension_semantics<parallel>], iteration_bounds = array<i64: 2>, scalar_prefetch = 0 : i64, scratch_operands = 0 : i64, tpu.core_type = #tpu.core_type<tc>, window_params = [{transform_indices = @transform_0, window_bounds = array<i64: 208, 128>}, {pipeline_mode = #tpu.pipeline_mode<synchronous>, transform_indices = @transform_1, window_bounds = array<i64: 128, 8>}, {pipeline_mode = #tpu.pipeline_mode<synchronous>, transform_indices = @transform_2, window_bounds = array<i64: 1, 8>}, {transform_indices = @transform_3, window_bounds = array<i64: 208, 8>}]} {
    %c0 = arith.constant 0 : index
    %c0_0 = arith.constant 0 : index
    %0 = vector.load %arg1[%c0, %c0_0] : memref<208x128xbf16, #tpu.memory_space<vmem>>, vector<208x128xbf16>
    %c0_1 = arith.constant 0 : index
    %c0_2 = arith.constant 0 : index
    %1 = vector.load %arg2[%c0_1, %c0_2] : memref<128x8xbf16, #tpu.memory_space<vmem>>, vector<128x8xbf16>
    %cst = arith.constant dense<0.000000e+00> : vector<208x8xf32>
    %2 = tpu.matmul %0, %1, %cst {dimension_numbers = #tpu.dot_dimension_numbers<[1], [0], [0], [1], [0, 0, 1, 1], [], []>} : vector<208x128xbf16>, vector<128x8xbf16>, vector<208x8xf32> -> vector<208x8xf32>
    %c0_3 = arith.constant 0 : index
    %c0_4 = arith.constant 0 : index
    %3 = vector.load %arg3[%c0_3, %c0_4] : memref<1x8xf32, #tpu.memory_space<vmem>>, vector<1x8xf32>
    %4 = vector.broadcast %3 : vector<1x8xf32> to vector<208x8xf32>
    %5 = arith.addf %2, %4 : vector<208x8xf32>
    %cst_5 = arith.constant 0.000000e+00 : f32
    %6 = vector.broadcast %cst_5 : f32 to vector<208x8xf32>
    %7 = arith.maximumf %5, %6 : vector<208x8xf32>
    %8 = arith.truncf %7 : vector<208x8xf32> to vector<208x8xbf16>
    %c0_6 = arith.constant 0 : index
    %c0_7 = arith.constant 0 : index
    %9 = vector.load %arg4[%c0_6, %c0_7] : memref<208x8xbf16, #tpu.memory_space<vmem>>, vector<208x8xbf16>
    tpu.vector_store %arg4[%c0_6, %c0_7], %8 {strides = array<i32>} : memref<208x8xbf16, #tpu.memory_space<vmem>>, vector<208x8xbf16>,
    return
  }
  func.func @transform_0(%arg0: i32) -> (i32, i32) {
    %c0_i32 = arith.constant 0 : i32
    %c0_i32_0 = arith.constant 0 : i32
    return %arg0, %c0_i32 : i32, i32
  }
  func.func @transform_1(%arg0: i32) -> (i32, i32) {
    %c0_i32 = arith.constant 0 : i32
    %c0_i32_0 = arith.constant 0 : i32
    %c0_i32_1 = arith.constant 0 : i32
    return %c0_i32, %c0_i32_0 : i32, i32
  }
  func.func @transform_2(%arg0: i32) -> (i32, i32) {
    %c0_i32 = arith.constant 0 : i32
    %c0_i32_0 = arith.constant 0 : i32
    %c0_i32_1 = arith.constant 0 : i32
    return %c0_i32, %c0_i32_0 : i32, i32
  }
  func.func @transform_3(%arg0: i32) -> (i32, i32) {
    %c0_i32 = arith.constant 0 : i32
    %c0_i32_0 = arith.constant 0 : i32
    return %arg0, %c0_i32 : i32, i32
  }
}

</mosaic_0001>

<llo_original>
// kernel: tpu_custom_call.1
$region0: #{tpu_custom_call.1}
  #allocation0 [shape = 'u32[]', space=smem, size = 0x4, offset = 0x4, fixed_abs, tag = 'smem constant byte address 0x4 - core index']
  #allocation1 [shape = 'u32[144,128]{1,0:T(1,128)}', space=vmem, size = 0x12000, scoped, tag = 'internal scratch']
  %s0 = inlined_call_operand.hbm [shape: bf16[392,128], index: 0, kind: input, shape index: {}]
  %s1 = inlined_call_operand.vmem [shape: bf16[128,8], index: 1, kind: input, shape index: {}]
  %s2 = inlined_call_operand.vmem [shape: f32[1,8], index: 2, kind: input, shape index: {}]
  %s3 = inlined_call_operand.vmem [shape: bf16[392,8], index: 3, kind: output, shape index: {}]
  %s4 = sld [smem:[#allocation0]]
  $region93: #{tpu_custom_call.1} parent=0
    _
  %s6 = ssub.s32 1, %s4
  %s7 = scalar_select 0, %s6, %s4
  $region1: #{tpu_custom_call.1} parent=0
    #allocation2 [shape = 'u8[106496]{0}', space=vmem, size = 0x1a000, scoped, tag = 'input window, operand 0']
    #allocation3 [shape = 's32[2]{0}', space=sflag, size = 0x8, scoped, tag = 'scoped memory for tpu_custom_call.1']
    #allocation4 [shape = 'u8[106496]{0}', space=vmem, size = 0x1a000, scoped, tag = 'output window, operand 0']
    %8 = vsyncpa [#allocation3], 0
    %s9 = scalar_lea.sflag [#allocation3], 1
    %10 = vsyncpa %s9, 0
    loop: start=0, step=1, limit=4
    $region2: #{tpu_custom_call.1} parent=1 // loop_pre_header
      _
    $region3: #{tpu_custom_call.1} parent=1 // loop_header
      %s12 = sphi 0, %s16
      %p13 = scmp.ge.s32.totalorder %s12, 4
      %s22 = sphi 0, %s24
      %s25 = sphi 0, %s22
      %s26 = sphi 0, %s25
      %s42 = sphi 0, %s26
      %s46 = sphi 0, %s46
      %s48 = sphi 0, %s46
      %s49 = sphi 0, %s48
      %s63 = sphi 0, %s49
      %s67 = sphi 0, %s67
      %s69 = sphi 0, %s67
      %s70 = sphi 0, %s69
      %s84 = sphi 0, %s70
      %s90 = sphi 0, %s92
      %s93 = sphi 0, %s90
      %s94 = sphi 0, %s93
      %s110 = sphi 0, %s94
    $region4: #{tpu_custom_call.1} parent=1 // loop_header_branch
      %15 = sbr.rel (%p13) target = $region8
    $region5: #{tpu_custom_call.1} parent=1 // loop_body
      %s17 = ssub.s32 %s12, 1
      %s18 = ssub.s32 %s12, 2
      %s19 = sadd.s32 %s12, 1
      %s20 = ssub.s32 %s12, %s19
      %p21 = scmp.eq.s32.totalorder %s20, 0
      %s23 = sadd.s32 %s22, 1
      %s24 = scalar_select %p21, %s22, %s23
      %p27 = pneg %p21
      %p28 = scmp.eq.s32.totalorder %s12, 1
      %p29 = por %p27, %p28
      %p30 = scmp.ne.s32.totalorder %s22, %s25
      %p31 = scmp.eq.s32.totalorder %s12, 0
      %p32 = por %p30, %p31
      %p33 = scmp.ne.s32.totalorder %s22, %s25
      %p34 = scmp.eq.s32.totalorder %s17, 1
      %p35 = por %p33, %p34
      %p36 = scmp.ne.s32.totalorder %s25, %s26
      %p37 = scmp.eq.s32.totalorder %s17, 0
      %p38 = por %p36, %p37
      %p39 = scmp.ne.s32.totalorder %s25, %s26
      %p40 = scmp.eq.s32.totalorder %s18, 1
      %p41 = por %p39, %p40
      %p43 = scmp.ne.s32.totalorder %s26, %s42
      %p44 = scmp.eq.s32.totalorder %s18, 0
      %p45 = por %p43, %p44
      %s47 = sadd.s32 %s46, 1
      %p50 = scmp.eq.s32.totalorder %s12, 1
      %p51 = scmp.ne.s32.totalorder %s46, %s48
      %p52 = scmp.eq.s32.totalorder %s12, 0
      %p53 = por %p51, %p52
      %p54 = scmp.ne.s32.totalorder %s46, %s48
      %p55 = scmp.eq.s32.totalorder %s17, 1
      %p56 = por %p54, %p55
      %p57 = scmp.ne.s32.totalorder %s48, %s49
      %p58 = scmp.eq.s32.totalorder %s17, 0
      %p59 = por %p57, %p58
      %p60 = scmp.ne.s32.totalorder %s48, %s49
      %p61 = scmp.eq.s32.totalorder %s18, 1
      %p62 = por %p60, %p61
      %p64 = scmp.ne.s32.totalorder %s49, %s63
      %p65 = scmp.eq.s32.totalorder %s18, 0
      %p66 = por %p64, %p65
      %s68 = sadd.s32 %s67, 1
      %p71 = scmp.eq.s32.totalorder %s12, 1
      %p72 = scmp.ne.s32.totalorder %s67, %s69
      %p73 = scmp.eq.s32.totalorder %s12, 0
      %p74 = por %p72, %p73
      %p75 = scmp.ne.s32.totalorder %s67, %s69
      %p76 = scmp.eq.s32.totalorder %s17, 1
      %p77 = por %p75, %p76
      %p78 = scmp.ne.s32.totalorder %s69, %s70
      %p79 = scmp.eq.s32.totalorder %s17, 0
      %p80 = por %p78, %p79
      %p81 = scmp.ne.s32.totalorder %s69, %s70
      %p82 = scmp.eq.s32.totalorder %s18, 1
      %p83 = por %p81, %p82
      %p85 = scmp.ne.s32.totalorder %s70, %s84
      %p86 = scmp.eq.s32.totalorder %s18, 0
      %p87 = por %p85, %p86
      %s88 = ssub.s32 %s12, %s19
      %p89 = scmp.eq.s32.totalorder %s88, 0
      %s91 = sadd.s32 %s90, 1
      %s92 = scalar_select %p89, %s90, %s91
      %p95 = pneg %p89
      %p96 = scmp.eq.s32.totalorder %s12, 1
      %p97 = por %p95, %p96
      %p98 = scmp.ne.s32.totalorder %s90, %s93
      %p99 = scmp.eq.s32.totalorder %s12, 0
      %p100 = por %p98, %p99
      %p101 = scmp.ne.s32.totalorder %s90, %s93
      %p102 = scmp.eq.s32.totalorder %s17, 1
      %p103 = por %p101, %p102
      %p104 = scmp.ne.s32.totalorder %s93, %s94
      %p105 = scmp.eq.s32.totalorder %s17, 0
      %p106 = por %p104, %p105
      %p107 = scmp.ne.s32.totalorder %s93, %s94
      %p108 = scmp.eq.s32.totalorder %s18, 1
      %p109 = por %p107, %p108
      %p111 = scmp.ne.s32.totalorder %s94, %s110
      %p112 = scmp.eq.s32.totalorder %s18, 0
      %p113 = por %p111, %p112
      %p114 = scmp.le.s32.totalorder 1, %s12
      %p115 = scmp.lt.s32.totalorder %s12, 3
      %p116 = pnand %p114, %p115
      %p117 = pneg %p116
      // Predicated region
      $region9: #{tpu_custom_call.1} parent=5 // pred_check
        _
      $region10: #{tpu_custom_call.1} parent=5 // pred_check_branch
        %119 = sbr.rel (%p116) target = $region12
      $region11: #{tpu_custom_call.1} parent=5 // pred_region
        %s120 = ssub.s32 %s12, 1
        // Predicated region
        $region13: #{tpu_custom_call.1} parent=11 // pred_check
          %p121 = pneg %p59
        $region14: #{tpu_custom_call.1} parent=11 // pred_check_branch
          %123 = sbr.rel (%p121) target = $region16
        $region15: #{tpu_custom_call.1} parent=11 // pred_region
          _
        $region16: #{tpu_custom_call.1} parent=11 // pred_fallthru
          _
        // Predicated region
        $region17: #{tpu_custom_call.1} parent=11 // pred_check
          %p124 = pneg %p80
        $region18: #{tpu_custom_call.1} parent=11 // pred_check_branch
          %126 = sbr.rel (%p124) target = $region20
        $region19: #{tpu_custom_call.1} parent=11 // pred_region
          _
        $region20: #{tpu_custom_call.1} parent=11 // pred_fallthru
          _
      $region12: #{tpu_custom_call.1} parent=5 // pred_fallthru
        _
      %p127 = scmp.lt.s32.totalorder %s12, 2
      // Predicated region
      $region21: #{tpu_custom_call.1} parent=5 // pred_check
        %p128 = pneg %p127
      $region22: #{tpu_custom_call.1} parent=5 // pred_check_branch
        %130 = sbr.rel (%p128) target = $region24
      $region23: #{tpu_custom_call.1} parent=5 // pred_region
        // Predicated region
        $region25: #{tpu_custom_call.1} parent=23 // pred_check
          %p131 = pneg %p32
        $region26: #{tpu_custom_call.1} parent=23 // pred_check_branch
          %133 = sbr.rel (%p131) target = $region28
        $region27: #{tpu_custom_call.1} parent=23 // pred_region
          %s134 = sand.u32 %s22, 1
          %s135 = scalar_lea.sflag [#allocation3], %s134
          %s136 = sand.u32 %s22, 1
          %s137 = smul.addr %s136, 104
          %s138 = scalar_lea.vmem [#allocation2], %s137
          %s139 = smul.u32 26, %s12
          %s140 = ssub.s32 49, %s139
          %p141 = scmp.lt.s32.totalorder %s140, 26
          %s142 = scalar_select %p141, %s140, 26
          %s143 = smul.u32 64, %s142
          %s145 = ssub.s32 1664, %s143
          %146 = vsyncadd %s135, %s145
          %p147 = scmp.ne.s32.totalorder 0, %s143
          %s148 = smul.addr %s139, 64
          %s149 = scalar_lea.hbm %s0, %s148
          %s150 = smul.u32 4, %s142
          %s151 = sshll.u32 %s138, 4
          %s152 = int_to_ptr.vmem [resolvable:$true] %s151
          %s153 = sshll.u32 %s150, 4
          %157 = dma.hbm_to_vmem [thread:$0]  (%p147), %s149, %s153, %s152, %s135, 64, 64, 4
        $region28: #{tpu_custom_call.1} parent=23 // pred_fallthru
          _
      $region24: #{tpu_custom_call.1} parent=5 // pred_fallthru
        _
      %p158 = scmp.le.s32.totalorder 1, %s12
      %p159 = scmp.lt.s32.totalorder %s12, 3
      %p160 = pnand %p158, %p159
      %p161 = pneg %p160
      // Predicated region
      $region29: #{tpu_custom_call.1} parent=5 // pred_check
        _
      $region30: #{tpu_custom_call.1} parent=5 // pred_check_branch
        %163 = sbr.rel (%p160) target = $region32
      $region31: #{tpu_custom_call.1} parent=5 // pred_region
        %s164 = ssub.s32 %s12, 1
        %s165 = sand.u32 %s25, 1
        %s166 = scalar_lea.sflag [#allocation3], %s165
        %s167 = sand.u32 %s25, 1
        %s168 = smul.addr %s167, 104
        %s169 = scalar_lea.vmem [#allocation2], %s168
        // Predicated region
        $region33: #{tpu_custom_call.1} parent=31 // pred_check
          %p170 = pneg %p38
        $region34: #{tpu_custom_call.1} parent=31 // pred_check_branch
          %172 = sbr.rel (%p170) target = $region36
        $region35: #{tpu_custom_call.1} parent=31 // pred_region
          %173 = dma.done %s166, 1664
        $region36: #{tpu_custom_call.1} parent=31 // pred_fallthru
          _
        %s174 = sand.u32 %s25, 1
        %s175 = scalar_lea.sflag [#allocation3], %s174
        %s176 = sand.u32 %s25, 1
        %s177 = smul.addr %s176, 104
        %s178 = scalar_lea.vmem [#allocation2], %s177
        %p179 = pneg %p38
        %p180 = pneg %p35
        %p181 = pneg %p59
        %p182 = pneg %p56
        %p183 = pneg %p80
        %p184 = pneg %p77
        %p185 = pneg %p106
        %p186 = pneg %p103
        %s187 = sand.u32 %s93, 1
        %s188 = sand.u32 %s93, 1
        %s189 = smul.addr %s188, 104
        %s190 = scalar_lea.vmem [#allocation4], %s189
        %s191 = smul.u32 26, %s17
        %s192 = ssub.s32 49, %s191
        %p193 = scmp.lt.s32.totalorder %s192, 26
        %s194 = scalar_select %p193, %s192, 26
        %s195 = smul.u32 64, %s194
        %s196 = smul.u32 26, %s17
        %s197 = ssub.s32 49, %s196
        %p198 = scmp.lt.s32.totalorder %s197, 26
        %s199 = scalar_select %p198, %s197, 26
        %s200 = smul.u32 64, %s199
        %v202 = vld [vmem:[%s169] sm:$0xf]
        %v203 = vld [vmem:[%s169 + $0x4] sm:$0xf]
        %v204 = vld [vmem:[%s169 + $0x8] sm:$0xf]
        %v205 = vld [vmem:[%s169 + $0xc] sm:$0xf]
        %v206 = vld [vmem:[%s169 + $0x10] sm:$0xf]
        %v207 = vld [vmem:[%s169 + $0x14] sm:$0xf]
        %v208 = vld [vmem:[%s169 + $0x18] sm:$0xf]
        %v209 = vld [vmem:[%s169 + $0x1c] sm:$0xf]
        %v210 = vld [vmem:[%s169 + $0x20] sm:$0xf]
        %v211 = vld [vmem:[%s169 + $0x24] sm:$0xf]
        %v212 = vld [vmem:[%s169 + $0x28] sm:$0xf]
        %v213 = vld [vmem:[%s169 + $0x2c] sm:$0xf]
        %v214 = vld [vmem:[%s169 + $0x30] sm:$0xf]
        %v215 = vld [vmem:[%s169 + $0x34] sm:$0xf]
        %v216 = vld [vmem:[%s169 + $0x38] sm:$0xf]
        %v217 = vld [vmem:[%s169 + $0x3c] sm:$0xf]
        %v218 = vld [vmem:[%s169 + $0x40] sm:$0xf]
        %v219 = vld [vmem:[%s169 + $0x44] sm:$0xf]
        %v220 = vld [vmem:[%s169 + $0x48] sm:$0xf]
        %v221 = vld [vmem:[%s169 + $0x4c] sm:$0xf]
        %v222 = vld [vmem:[%s169 + $0x50] sm:$0xf]
        %v223 = vld [vmem:[%s169 + $0x54] sm:$0xf]
        %v224 = vld [vmem:[%s169 + $0x58] sm:$0xf]
        %v225 = vld [vmem:[%s169 + $0x5c] sm:$0xf]
        %v226 = vld [vmem:[%s169 + $0x60] sm:$0xf]
        %v227 = vld [vmem:[%s169 + $0x64] sm:$0xf]
        %v228 = vld [vmem:[%s1] sm:$0xf]
        %v229 = vld [vmem:[%s1 + $0x4] sm:$0xf]
        %v230 = vld [vmem:[%s1 + $0x8] sm:$0xf]
        %v231 = vld [vmem:[%s1 + $0xc] sm:$0xf]
        %v232 = vld [vmem:[%s1 + $0x10] sm:$0xf]
        %v233 = vld [vmem:[%s1 + $0x14] sm:$0xf]
        %v234 = vld [vmem:[%s1 + $0x18] sm:$0xf]
        %v235 = vld [vmem:[%s1 + $0x1c] sm:$0xf]
        %v236 = vld [vmem:[%s1 + $0x20] sm:$0xf]
        %v237 = vld [vmem:[%s1 + $0x24] sm:$0xf]
        %v238 = vld [vmem:[%s1 + $0x28] sm:$0xf]
        %v239 = vld [vmem:[%s1 + $0x2c] sm:$0xf]
        %v240 = vld [vmem:[%s1 + $0x30] sm:$0xf]
        %v241 = vld [vmem:[%s1 + $0x34] sm:$0xf]
        %v242 = vld [vmem:[%s1 + $0x38] sm:$0xf]
        %v243 = vld [vmem:[%s1 + $0x3c] sm:$0xf]
        %v244 = vld [vmem:[%s2] sm:$0x1]
        %v246 = vlaneseq
        %v247 = vshrl.u32 %v246, 7
        %v248 = vsub.s32 0, %v247
        %v249 = vrot.slane %v244, %v248
        %v277 = vunpack.c.l.b16 %v202
        %v278 = vunpack.c.l.b16 %v203
        %v279 = vunpack.c.l.b16 %v204
        %v280 = vunpack.c.l.b16 %v205
        %v281 = vunpack.c.l.b16 %v206
        %v282 = vunpack.c.l.b16 %v207
        %v283 = vunpack.c.l.b16 %v208
        %v284 = vunpack.c.l.b16 %v209
        %v285 = vunpack.c.l.b16 %v210
        %v286 = vunpack.c.l.b16 %v211
        %v287 = vunpack.c.l.b16 %v212
        %v288 = vunpack.c.l.b16 %v213
        %v289 = vunpack.c.l.b16 %v214
        %v290 = vunpack.c.l.b16 %v215
        %v291 = vunpack.c.l.b16 %v216
        %v292 = vunpack.c.l.b16 %v217
        %v293 = vunpack.c.l.b16 %v218
        %v294 = vunpack.c.l.b16 %v219
        %v295 = vunpack.c.l.b16 %v220
        %v296 = vunpack.c.l.b16 %v221
        %v297 = vunpack.c.l.b16 %v222
        %v298 = vunpack.c.l.b16 %v223
        %v299 = vunpack.c.l.b16 %v224
        %v300 = vunpack.c.l.b16 %v225
        %v301 = vunpack.c.l.b16 %v226
        %v302 = vunpack.c.l.b16 %v227
        %v303 = vpack.c.b16 %v278, %v277
        %v304 = vpack.c.b16 %v280, %v279
        %v305 = vpack.c.b16 %v282, %v281
        %v306 = vpack.c.b16 %v284, %v283
        %v307 = vpack.c.b16 %v286, %v285
        %v308 = vpack.c.b16 %v288, %v287
        %v309 = vpack.c.b16 %v290, %v289
        %v310 = vpack.c.b16 %v292, %v291
        %v311 = vpack.c.b16 %v294, %v293
        %v312 = vpack.c.b16 %v296, %v295
        %v313 = vpack.c.b16 %v298, %v297
        %v314 = vpack.c.b16 %v300, %v299
        %v315 = vpack.c.b16 %v302, %v301
        %v345 = vunpack.c.l.b16 %v228
        %v346 = vunpack.c.l.b16 %v229
        %v347 = vunpack.c.l.b16 %v230
        %v348 = vunpack.c.l.b16 %v231
        %v349 = vunpack.c.l.b16 %v232
        %v350 = vunpack.c.l.b16 %v233
        %v351 = vunpack.c.l.b16 %v234
        %v352 = vunpack.c.l.b16 %v235
        %v353 = vunpack.c.l.b16 %v236
        %v354 = vunpack.c.l.b16 %v237
        %v355 = vunpack.c.l.b16 %v238
        %v356 = vunpack.c.l.b16 %v239
        %v357 = vunpack.c.l.b16 %v240
        %v358 = vunpack.c.l.b16 %v241
        %v359 = vunpack.c.l.b16 %v242
        %v360 = vunpack.c.l.b16 %v243
        %v361 = vpack.c.b16 %v346, %v345
        %v362 = vpack.c.b16 %v348, %v347
        %v363 = vpack.c.b16 %v350, %v349
        %v364 = vpack.c.b16 %v352, %v351
        %v365 = vpack.c.b16 %v354, %v353
        %v366 = vpack.c.b16 %v356, %v355
        %v367 = vpack.c.b16 %v358, %v357
        %v368 = vpack.c.b16 %v360, %v359
        %377 = vmatprep.subr.bf16.mxu0 0
        %378 = vmatpush1.bf16.msra.mxu0 %v361
        %379 = vmatprep.subr.bf16.mxu0 0
        %380 = vmatpush1.bf16.msra.mxu0 %v362
        %381 = vmatprep.subr.bf16.mxu0 0
        %382 = vmatpush1.bf16.msra.mxu0 %v363
        %383 = vmatprep.subr.bf16.mxu0 0
        %384 = vmatpush1.bf16.msra.mxu0 %v364
        %385 = vmatprep.subr.bf16.mxu0 0
        %386 = vmatpush1.bf16.msra.mxu0 %v365
        %387 = vmatprep.subr.bf16.mxu0 0
        %388 = vmatpush1.bf16.msra.mxu0 %v366
        %389 = vmatprep.subr.bf16.mxu0 0
        %390 = vmatpush1.bf16.msra.mxu0 %v367
        %391 = vmatprep.subr.bf16.mxu0 0
        %392 = vmatpush1.bf16.msra.mxu0 %v368
        %393 = vmatprep.subr.bf16.mxu0 0
        %394 = vmatpush1.bf16.msra.mxu0 0
        %395 = vmatprep.subr.bf16.mxu0 0
        %396 = vmatpush1.bf16.msra.mxu0 0
        %397 = vmatprep.subr.bf16.mxu0 0
        %398 = vmatpush1.bf16.msra.mxu0 0
        %399 = vmatprep.subr.bf16.mxu0 0
        %400 = vmatpush1.bf16.msra.mxu0 0
        %401 = vmatprep.subr.bf16.mxu0 0
        %402 = vmatpush1.bf16.msra.mxu0 0
        %403 = vmatprep.subr.bf16.mxu0 0
        %404 = vmatpush1.bf16.msra.mxu0 0
        %405 = vmatprep.subr.bf16.mxu0 0
        %406 = vmatpush1.bf16.msra.mxu0 0
        %407 = vmatprep.subr.bf16.mxu0 0
        %408 = vmatpush1.bf16.msra.mxu0 0
        %409 = vmatprep.mubr.bf16.mxu0 0
        %410 = vmatmul.mubr.bf16.gmra.mrb[0].mxu0 %v303
        %v411 = vpop.f32.mrb[0].mxu0
        %v412 = vadd.f32 %v249, %v411
        %v413 = vpop.f32.mrb[0].mxu0
        %v414 = vpop.f32.mrb[0].mxu0
        %v415 = vadd.f32 %v249, %v414
        %v416 = vpop.f32.mrb[0].mxu0
        %417 = vmatprep.mubr.bf16.mxu0 0
        %418 = vmatmul.mubr.bf16.gmra.mrb[0].mxu0 %v304
        %v419 = vpop.f32.mrb[0].mxu0
        %v420 = vadd.f32 %v249, %v419
        %v421 = vpop.f32.mrb[0].mxu0
        %v422 = vpop.f32.mrb[0].mxu0
        %v423 = vadd.f32 %v249, %v422
        %v424 = vpop.f32.mrb[0].mxu0
        %425 = vmatprep.mubr.bf16.mxu0 0
        %426 = vmatmul.mubr.bf16.gmra.mrb[0].mxu0 %v305
        %v427 = vpop.f32.mrb[0].mxu0
        %v428 = vadd.f32 %v249, %v427
        %v429 = vpop.f32.mrb[0].mxu0
        %v430 = vpop.f32.mrb[0].mxu0
        %v431 = vadd.f32 %v249, %v430
        %v432 = vpop.f32.mrb[0].mxu0
        %433 = vmatprep.mubr.bf16.mxu0 0
        %434 = vmatmul.mubr.bf16.gmra.mrb[0].mxu0 %v306
        %v435 = vpop.f32.mrb[0].mxu0
        %v436 = vadd.f32 %v249, %v435
        %v437 = vpop.f32.mrb[0].mxu0
        %v438 = vpop.f32.mrb[0].mxu0
        %v439 = vadd.f32 %v249, %v438
        %v440 = vpop.f32.mrb[0].mxu0
        %441 = vmatprep.mubr.bf16.mxu0 0
        %442 = vmatmul.mubr.bf16.gmra.mrb[0].mxu0 %v307
        %v443 = vpop.f32.mrb[0].mxu0
        %v444 = vadd.f32 %v249, %v443
        %v445 = vpop.f32.mrb[0].mxu0
        %v446 = vpop.f32.mrb[0].mxu0
        %v447 = vadd.f32 %v249, %v446
        %v448 = vpop.f32.mrb[0].mxu0
        %449 = vmatprep.mubr.bf16.mxu0 0
        %450 = vmatmul.mubr.bf16.gmra.mrb[0].mxu0 %v308
        %v451 = vpop.f32.mrb[0].mxu0
        %v452 = vadd.f32 %v249, %v451
        %v453 = vpop.f32.mrb[0].mxu0
        %v454 = vpop.f32.mrb[0].mxu0
        %v455 = vadd.f32 %v249, %v454
        %v456 = vpop.f32.mrb[0].mxu0
        %457 = vmatprep.mubr.bf16.mxu0 0
        %458 = vmatmul.mubr.bf16.gmra.mrb[0].mxu0 %v309
        %v459 = vpop.f32.mrb[0].mxu0
        %v460 = vadd.f32 %v249, %v459
        %v461 = vpop.f32.mrb[0].mxu0
        %v462 = vpop.f32.mrb[0].mxu0
        %v463 = vadd.f32 %v249, %v462
        %v464 = vpop.f32.mrb[0].mxu0
        %465 = vmatprep.mubr.bf16.mxu0 0
        %466 = vmatmul.mubr.bf16.gmra.mrb[0].mxu0 %v310
        %v467 = vpop.f32.mrb[0].mxu0
        %v468 = vadd.f32 %v249, %v467
        %v469 = vpop.f32.mrb[0].mxu0
        %v470 = vpop.f32.mrb[0].mxu0
        %v471 = vadd.f32 %v249, %v470
        %v472 = vpop.f32.mrb[0].mxu0
        %473 = vmatprep.mubr.bf16.mxu0 0
        %474 = vmatmul.mubr.bf16.gmra.mrb[0].mxu0 %v311
        %v475 = vpop.f32.mrb[0].mxu0
        %v476 = vadd.f32 %v249, %v475
        %v477 = vpop.f32.mrb[0].mxu0
        %v478 = vpop.f32.mrb[0].mxu0
        %v479 = vadd.f32 %v249, %v478
        %v480 = vpop.f32.mrb[0].mxu0
        %481 = vmatprep.mubr.bf16.mxu0 0
        %482 = vmatmul.mubr.bf16.gmra.mrb[0].mxu0 %v312
        %v483 = vpop.f32.mrb[0].mxu0
        %v484 = vadd.f32 %v249, %v483
        %v485 = vpop.f32.mrb[0].mxu0
        %v486 = vpop.f32.mrb[0].mxu0
        %v487 = vadd.f32 %v249, %v486
        %v488 = vpop.f32.mrb[0].mxu0
        %489 = vmatprep.mubr.bf16.mxu0 0
        %490 = vmatmul.mubr.bf16.gmra.mrb[0].mxu0 %v313
        %v491 = vpop.f32.mrb[0].mxu0
        %v492 = vadd.f32 %v249, %v491
        %v493 = vpop.f32.mrb[0].mxu0
        %v494 = vpop.f32.mrb[0].mxu0
        %v495 = vadd.f32 %v249, %v494
        %v496 = vpop.f32.mrb[0].mxu0
        %497 = vmatprep.mubr.bf16.mxu0 0
        %498 = vmatmul.mubr.bf16.gmra.mrb[0].mxu0 %v314
        %v499 = vpop.f32.mrb[0].mxu0
        %v500 = vadd.f32 %v249, %v499
        %v501 = vpop.f32.mrb[0].mxu0
        %v502 = vpop.f32.mrb[0].mxu0
        %v503 = vadd.f32 %v249, %v502
        %v504 = vpop.f32.mrb[0].mxu0
        %505 = vmatprep.mubr.bf16.mxu0 0
        %506 = vmatmul.mubr.bf16.gmra.mrb[0].mxu0 %v315
        %v507 = vpop.f32.mrb[0].mxu0
        %v508 = vadd.f32 %v249, %v507
        %v509 = vpop.f32.mrb[0].mxu0
        %v510 = vpop.f32.mrb[0].mxu0
        %v511 = vadd.f32 %v249, %v510
        %v512 = vpop.f32.mrb[0].mxu0
        %513 = vdwg.mxu0
        %v514 = vmax.f32 %v412, 0.0
        %v515 = vmax.f32 %v415, 0.0
        %v516 = vmax.f32 %v420, 0.0
        %v517 = vmax.f32 %v423, 0.0
        %v518 = vmax.f32 %v428, 0.0
        %v519 = vmax.f32 %v431, 0.0
        %v520 = vmax.f32 %v436, 0.0
        %v521 = vmax.f32 %v439, 0.0
        %v522 = vmax.f32 %v444, 0.0
        %v523 = vmax.f32 %v447, 0.0
        %v524 = vmax.f32 %v452, 0.0
        %v525 = vmax.f32 %v455, 0.0
        %v526 = vmax.f32 %v460, 0.0
        %v527 = vmax.f32 %v463, 0.0
        %v528 = vmax.f32 %v468, 0.0
        %v529 = vmax.f32 %v471, 0.0
        %v530 = vmax.f32 %v476, 0.0
        %v531 = vmax.f32 %v479, 0.0
        %v532 = vmax.f32 %v484, 0.0
        %v533 = vmax.f32 %v487, 0.0
        %v534 = vmax.f32 %v492, 0.0
        %v535 = vmax.f32 %v495, 0.0
        %v536 = vmax.f32 %v500, 0.0
        %v537 = vmax.f32 %v503, 0.0
        %v538 = vmax.f32 %v508, 0.0
        %v539 = vmax.f32 %v511, 0.0
        %v540 = vpack.c.bf16 %v515, %v514
        %v541 = vpack.c.bf16 %v517, %v516
        %v542 = vpack.c.bf16 %v519, %v518
        %v543 = vpack.c.bf16 %v521, %v520
        %v544 = vpack.c.bf16 %v523, %v522
        %v545 = vpack.c.bf16 %v525, %v524
        %v546 = vpack.c.bf16 %v527, %v526
        %v547 = vpack.c.bf16 %v529, %v528
        %v548 = vpack.c.bf16 %v531, %v530
        %v549 = vpack.c.bf16 %v533, %v532
        %v550 = vpack.c.bf16 %v535, %v534
        %v551 = vpack.c.bf16 %v537, %v536
        %v552 = vpack.c.bf16 %v539, %v538
        %v566 = vunpack.c.l.b16 %v540
        %v567 = vunpack.c.h.b16 %v540
        %v568 = vunpack.c.l.b16 %v541
        %v569 = vunpack.c.h.b16 %v541
        %v570 = vunpack.c.l.b16 %v542
        %v571 = vunpack.c.h.b16 %v542
        %v572 = vunpack.c.l.b16 %v543
        %v573 = vunpack.c.h.b16 %v543
        %v574 = vunpack.c.l.b16 %v544
        %v575 = vunpack.c.h.b16 %v544
        %v576 = vunpack.c.l.b16 %v545
        %v577 = vunpack.c.h.b16 %v545
        %v578 = vunpack.c.l.b16 %v546
        %v579 = vunpack.c.h.b16 %v546
        %v580 = vunpack.c.l.b16 %v547
        %v581 = vunpack.c.h.b16 %v547
        %v582 = vunpack.c.l.b16 %v548
        %v583 = vunpack.c.h.b16 %v548
        %v584 = vunpack.c.l.b16 %v549
        %v585 = vunpack.c.h.b16 %v549
        %v586 = vunpack.c.l.b16 %v550
        %v587 = vunpack.c.h.b16 %v550
        %v588 = vunpack.c.l.b16 %v551
        %v589 = vunpack.c.h.b16 %v551
        %v590 = vunpack.c.l.b16 %v552
        %v591 = vunpack.c.h.b16 %v552
        %v592 = vpack.c.b16 %v566, %v566
        %v593 = vpack.c.b16 %v567, %v567
        %v594 = vpack.c.b16 %v568, %v568
        %v595 = vpack.c.b16 %v569, %v569
        %v596 = vpack.c.b16 %v570, %v570
        %v597 = vpack.c.b16 %v571, %v571
        %v598 = vpack.c.b16 %v572, %v572
        %v599 = vpack.c.b16 %v573, %v573
        %v600 = vpack.c.b16 %v574, %v574
        %v601 = vpack.c.b16 %v575, %v575
        %v602 = vpack.c.b16 %v576, %v576
        %v603 = vpack.c.b16 %v577, %v577
        %v604 = vpack.c.b16 %v578, %v578
        %v605 = vpack.c.b16 %v579, %v579
        %v606 = vpack.c.b16 %v580, %v580
        %v607 = vpack.c.b16 %v581, %v581
        %v608 = vpack.c.b16 %v582, %v582
        %v609 = vpack.c.b16 %v583, %v583
        %v610 = vpack.c.b16 %v584, %v584
        %v611 = vpack.c.b16 %v585, %v585
        %v612 = vpack.c.b16 %v586, %v586
        %v613 = vpack.c.b16 %v587, %v587
        %v614 = vpack.c.b16 %v588, %v588
        %v615 = vpack.c.b16 %v589, %v589
        %v616 = vpack.c.b16 %v590, %v590
        %v617 = vpack.c.b16 %v591, %v591
        %vm644 = vcmask 60416
        %645 = vst.msk [vmem:[%s190] sm:$0xf] %vm644, %v592
        %646 = vst.msk [vmem:[%s190 + $0x4] sm:$0xf] %vm644, %v593
        %647 = vst.msk [vmem:[%s190 + $0x8] sm:$0xf] %vm644, %v594
        %648 = vst.msk [vmem:[%s190 + $0xc] sm:$0xf] %vm644, %v595
        %649 = vst.msk [vmem:[%s190 + $0x10] sm:$0xf] %vm644, %v596
        %650 = vst.msk [vmem:[%s190 + $0x14] sm:$0xf] %vm644, %v597
        %651 = vst.msk [vmem:[%s190 + $0x18] sm:$0xf] %vm644, %v598
        %652 = vst.msk [vmem:[%s190 + $0x1c] sm:$0xf] %vm644, %v599
        %653 = vst.msk [vmem:[%s190 + $0x20] sm:$0xf] %vm644, %v600
        %654 = vst.msk [vmem:[%s190 + $0x24] sm:$0xf] %vm644, %v601
        %655 = vst.msk [vmem:[%s190 + $0x28] sm:$0xf] %vm644, %v602
        %656 = vst.msk [vmem:[%s190 + $0x2c] sm:$0xf] %vm644, %v603
        %657 = vst.msk [vmem:[%s190 + $0x30] sm:$0xf] %vm644, %v604
        %658 = vst.msk [vmem:[%s190 + $0x34] sm:$0xf] %vm644, %v605
        %659 = vst.msk [vmem:[%s190 + $0x38] sm:$0xf] %vm644, %v606
        %660 = vst.msk [vmem:[%s190 + $0x3c] sm:$0xf] %vm644, %v607
        %661 = vst.msk [vmem:[%s190 + $0x40] sm:$0xf] %vm644, %v608
        %662 = vst.msk [vmem:[%s190 + $0x44] sm:$0xf] %vm644, %v609
        %663 = vst.msk [vmem:[%s190 + $0x48] sm:$0xf] %vm644, %v610
        %664 = vst.msk [vmem:[%s190 + $0x4c] sm:$0xf] %vm644, %v611
        %665 = vst.msk [vmem:[%s190 + $0x50] sm:$0xf] %vm644, %v612
        %666 = vst.msk [vmem:[%s190 + $0x54] sm:$0xf] %vm644, %v613
        %667 = vst.msk [vmem:[%s190 + $0x58] sm:$0xf] %vm644, %v614
        %668 = vst.msk [vmem:[%s190 + $0x5c] sm:$0xf] %vm644, %v615
        %669 = vst.msk [vmem:[%s190 + $0x60] sm:$0xf] %vm644, %v616
        %670 = vst.msk [vmem:[%s190 + $0x64] sm:$0xf] %vm644, %v617
        %s671 = sand.u32 %s93, 1
        %s672 = sand.u32 %s93, 1
        %s673 = smul.addr %s672, 104
        %s674 = scalar_lea.vmem [#allocation4], %s673
        // Predicated region
        $region37: #{tpu_custom_call.1} parent=31 // pred_check
          %p675 = pneg %p103
        $region38: #{tpu_custom_call.1} parent=31 // pred_check_branch
          %677 = sbr.rel (%p675) target = $region40
        $region39: #{tpu_custom_call.1} parent=31 // pred_region
          %s678 = smul.u32 26, %s17
          %s679 = ssub.s32 49, %s678
          %p680 = scmp.lt.s32.totalorder %s679, 26
          %s681 = scalar_select %p680, %s679, 26
          %s682 = smul.u32 64, %s681
          %p683 = scmp.ne.s32.totalorder 0, %s682
          %s684 = smul.addr %s678, 4
          %s685 = scalar_lea.vmem %s3, %s684
          // Predicated region
          $region41: #{tpu_custom_call.1} parent=39 // pred_check
            %p686 = pneg %p683
          $region42: #{tpu_custom_call.1} parent=39 // pred_check_branch
            %688 = sbr.rel (%p686) target = $region44
          $region43: #{tpu_custom_call.1} parent=39 // pred_region
            // Predicated region
            $region45: #{tpu_custom_call.1} parent=43 // pred_check
              _
            $region46: #{tpu_custom_call.1} parent=43 // pred_check_branch
              %690 = sbr.rel target = $region48
            $region47: #{tpu_custom_call.1} parent=43 // pred_region
              // Predicated region
              $region67: #{tpu_custom_call.1} parent=47 // pred_check
                _
              $region68: #{tpu_custom_call.1} parent=47 // pred_check_branch
                %790 = sbr.rel (0) target = $region70
              $region69: #{tpu_custom_call.1} parent=47 // pred_region
                %s792 = sdiv.u32.pop %s681, 26
                %s793 = srem.u32.pop %s681, 26
                // While loop
                $region71: #{tpu_custom_call.1} parent=69 // loop_pre_header
                  _
                $region72: #{tpu_custom_call.1} parent=69 // loop_header
                  %s795 = sphi 0, %s797
                  %p796 = scmp.ge.s32.totalorder %s795, %s792
                  %s800 = sphi 0, %s857
                  %s801 = sphi %s674, %s860
                  %s802 = sphi %s685, %s861
                $region73: #{tpu_custom_call.1} parent=69 // loop_header_branch
                  %799 = sbr.rel (%p796) target = $region77
                $region74: #{tpu_custom_call.1} parent=69 // loop_body
                  %v803 = vld [vmem:[%s801] sm:$0xf]
                  %804 = vst [vmem:[%s802] sm:$0xf] %v803
                  %v805 = vld [vmem:[%s801 + $0x4] sm:$0xf]
                  %806 = vst [vmem:[%s802 + $0x4] sm:$0xf] %v805
                  %v807 = vld [vmem:[%s801 + $0x8] sm:$0xf]
                  %808 = vst [vmem:[%s802 + $0x8] sm:$0xf] %v807
                  %v809 = vld [vmem:[%s801 + $0xc] sm:$0xf]
                  %810 = vst [vmem:[%s802 + $0xc] sm:$0xf] %v809
                  %v811 = vld [vmem:[%s801 + $0x10] sm:$0xf]
                  %812 = vst [vmem:[%s802 + $0x10] sm:$0xf] %v811
                  %v813 = vld [vmem:[%s801 + $0x14] sm:$0xf]
                  %814 = vst [vmem:[%s802 + $0x14] sm:$0xf] %v813
                  %v815 = vld [vmem:[%s801 + $0x18] sm:$0xf]
                  %816 = vst [vmem:[%s802 + $0x18] sm:$0xf] %v815
                  %v817 = vld [vmem:[%s801 + $0x1c] sm:$0xf]
                  %818 = vst [vmem:[%s802 + $0x1c] sm:$0xf] %v817
                  %v819 = vld [vmem:[%s801 + $0x20] sm:$0xf]
                  %820 = vst [vmem:[%s802 + $0x20] sm:$0xf] %v819
                  %v821 = vld [vmem:[%s801 + $0x24] sm:$0xf]
                  %822 = vst [vmem:[%s802 + $0x24] sm:$0xf] %v821
                  %v823 = vld [vmem:[%s801 + $0x28] sm:$0xf]
                  %824 = vst [vmem:[%s802 + $0x28] sm:$0xf] %v823
                  %v825 = vld [vmem:[%s801 + $0x2c] sm:$0xf]
                  %826 = vst [vmem:[%s802 + $0x2c] sm:$0xf] %v825
                  %v827 = vld [vmem:[%s801 + $0x30] sm:$0xf]
                  %828 = vst [vmem:[%s802 + $0x30] sm:$0xf] %v827
                  %v829 = vld [vmem:[%s801 + $0x34] sm:$0xf]
                  %830 = vst [vmem:[%s802 + $0x34] sm:$0xf] %v829
                  %v831 = vld [vmem:[%s801 + $0x38] sm:$0xf]
                  %832 = vst [vmem:[%s802 + $0x38] sm:$0xf] %v831
                  %v833 = vld [vmem:[%s801 + $0x3c] sm:$0xf]
                  %834 = vst [vmem:[%s802 + $0x3c] sm:$0xf] %v833
                  %v835 = vld [vmem:[%s801 + $0x40] sm:$0xf]
                  %836 = vst [vmem:[%s802 + $0x40] sm:$0xf] %v835
                  %v837 = vld [vmem:[%s801 + $0x44] sm:$0xf]
                  %838 = vst [vmem:[%s802 + $0x44] sm:$0xf] %v837
                  %v839 = vld [vmem:[%s801 + $0x48] sm:$0xf]
                  %840 = vst [vmem:[%s802 + $0x48] sm:$0xf] %v839
                  %v841 = vld [vmem:[%s801 + $0x4c] sm:$0xf]
                  %842 = vst [vmem:[%s802 + $0x4c] sm:$0xf] %v841
                  %v843 = vld [vmem:[%s801 + $0x50] sm:$0xf]
                  %844 = vst [vmem:[%s802 + $0x50] sm:$0xf] %v843
                  %v845 = vld [vmem:[%s801 + $0x54] sm:$0xf]
                  %846 = vst [vmem:[%s802 + $0x54] sm:$0xf] %v845
                  %v847 = vld [vmem:[%s801 + $0x58] sm:$0xf]
                  %848 = vst [vmem:[%s802 + $0x58] sm:$0xf] %v847
                  %v849 = vld [vmem:[%s801 + $0x5c] sm:$0xf]
                  %850 = vst [vmem:[%s802 + $0x5c] sm:$0xf] %v849
                  %v851 = vld [vmem:[%s801 + $0x60] sm:$0xf]
                  %852 = vst [vmem:[%s802 + $0x60] sm:$0xf] %v851
                  %v853 = vld [vmem:[%s801 + $0x64] sm:$0xf]
                  %854 = vst [vmem:[%s802 + $0x64] sm:$0xf] %v853
                  %s855 = sadd.s32 1, %s800
                  %p856 = scmp.ge.s32.totalorder %s855, %s792
                  %s857 = scalar_select %p856, 0, %s855
                  %s858 = smul.u32 %s857, 104
                  %s859 = smul.u32 %s857, 104
                  %s860 = scalar_lea.vmem %s674, %s858 [#allocation4]
                  %s861 = scalar_lea.vmem %s685, %s859
                $region75: #{tpu_custom_call.1} parent=69 // loop_footer
                  %s797 = sadd.s32 %s795, 1
                $region76: #{tpu_custom_call.1} parent=69 // loop_footer_branch
                  %794 = sbr.rel target = $region72
                $region77: #{tpu_custom_call.1} parent=69 // loop_exit
                  _
                %s862 = sdiv.u32.pop %s681, 26
                %s863 = srem.u32.pop %s681, 26
                %s864 = smul.u32 %s862, 26
                %s865 = smul.u32 4, %s864
                %s866 = scalar_lea.vmem %s674, %s865 [#allocation4]
                %s867 = smul.u32 4, %s864
                %s868 = scalar_lea.vmem %s685, %s867
                // While loop
                $region78: #{tpu_custom_call.1} parent=69 // loop_pre_header
                  _
                $region79: #{tpu_custom_call.1} parent=69 // loop_header
                  %s870 = sphi 0, %s872
                  %p871 = scmp.ge.s32.totalorder %s870, %s863
                  %s875 = sphi 0, %s882
                  %s876 = sphi %s866, %s885
                  %s877 = sphi %s868, %s886
                $region80: #{tpu_custom_call.1} parent=69 // loop_header_branch
                  %874 = sbr.rel (%p871) target = $region84
                $region81: #{tpu_custom_call.1} parent=69 // loop_body
                  %v878 = vld [vmem:[%s876] sm:$0xf]
                  %879 = vst [vmem:[%s877] sm:$0xf] %v878
                  %s880 = sadd.s32 1, %s875
                  %p881 = scmp.ge.s32.totalorder %s880, %s863
                  %s882 = scalar_select %p881, 0, %s880
                  %s883 = smul.u32 %s882, 4
                  %s884 = smul.u32 %s882, 4
                  %s885 = scalar_lea.vmem %s866, %s883 [#allocation4]
                  %s886 = scalar_lea.vmem %s868, %s884
                $region82: #{tpu_custom_call.1} parent=69 // loop_footer
                  %s872 = sadd.s32 %s870, 1
                $region83: #{tpu_custom_call.1} parent=69 // loop_footer_branch
                  %869 = sbr.rel target = $region79
                $region84: #{tpu_custom_call.1} parent=69 // loop_exit
                  _
              $region70: #{tpu_custom_call.1} parent=47 // pred_fallthru
                _
            $region48: #{tpu_custom_call.1} parent=43 // pred_fallthru
              _
            // Predicated region
            $region49: #{tpu_custom_call.1} parent=43 // pred_check
              _
            $region50: #{tpu_custom_call.1} parent=43 // pred_check_branch
              %692 = sbr.rel (0) target = $region52
            $region51: #{tpu_custom_call.1} parent=43 // pred_region
              %s694 = sdiv.u32.pop %s681, 26
              %s695 = srem.u32.pop %s681, 26
              // While loop
              $region53: #{tpu_custom_call.1} parent=51 // loop_pre_header
                _
              $region54: #{tpu_custom_call.1} parent=51 // loop_header
                %s697 = sphi 0, %s699
                %p698 = scmp.ge.s32.totalorder %s697, %s694
                %s702 = sphi 0, %s759
                %s703 = sphi %s674, %s762
                %s704 = sphi %s685, %s763
              $region55: #{tpu_custom_call.1} parent=51 // loop_header_branch
                %701 = sbr.rel (%p698) target = $region59
              $region56: #{tpu_custom_call.1} parent=51 // loop_body
                %v705 = vld [vmem:[%s703] sm:$0xf]
                %706 = vst [vmem:[%s704] sm:$0xf] %v705
                %v707 = vld [vmem:[%s703 + $0x4] sm:$0xf]
                %708 = vst [vmem:[%s704 + $0x4] sm:$0xf] %v707
                %v709 = vld [vmem:[%s703 + $0x8] sm:$0xf]
                %710 = vst [vmem:[%s704 + $0x8] sm:$0xf] %v709
                %v711 = vld [vmem:[%s703 + $0xc] sm:$0xf]
                %712 = vst [vmem:[%s704 + $0xc] sm:$0xf] %v711
                %v713 = vld [vmem:[%s703 + $0x10] sm:$0xf]
                %714 = vst [vmem:[%s704 + $0x10] sm:$0xf] %v713
                %v715 = vld [vmem:[%s703 + $0x14] sm:$0xf]
                %716 = vst [vmem:[%s704 + $0x14] sm:$0xf] %v715
                %v717 = vld [vmem:[%s703 + $0x18] sm:$0xf]
                %718 = vst [vmem:[%s704 + $0x18] sm:$0xf] %v717
                %v719 = vld [vmem:[%s703 + $0x1c] sm:$0xf]
                %720 = vst [vmem:[%s704 + $0x1c] sm:$0xf] %v719
                %v721 = vld [vmem:[%s703 + $0x20] sm:$0xf]
                %722 = vst [vmem:[%s704 + $0x20] sm:$0xf] %v721
                %v723 = vld [vmem:[%s703 + $0x24] sm:$0xf]
                %724 = vst [vmem:[%s704 + $0x24] sm:$0xf] %v723
                %v725 = vld [vmem:[%s703 + $0x28] sm:$0xf]
                %726 = vst [vmem:[%s704 + $0x28] sm:$0xf] %v725
                %v727 = vld [vmem:[%s703 + $0x2c] sm:$0xf]
                %728 = vst [vmem:[%s704 + $0x2c] sm:$0xf] %v727
                %v729 = vld [vmem:[%s703 + $0x30] sm:$0xf]
                %730 = vst [vmem:[%s704 + $0x30] sm:$0xf] %v729
                %v731 = vld [vmem:[%s703 + $0x34] sm:$0xf]
                %732 = vst [vmem:[%s704 + $0x34] sm:$0xf] %v731
                %v733 = vld [vmem:[%s703 + $0x38] sm:$0xf]
                %734 = vst [vmem:[%s704 + $0x38] sm:$0xf] %v733
                %v735 = vld [vmem:[%s703 + $0x3c] sm:$0xf]
                %736 = vst [vmem:[%s704 + $0x3c] sm:$0xf] %v735
                %v737 = vld [vmem:[%s703 + $0x40] sm:$0xf]
                %738 = vst [vmem:[%s704 + $0x40] sm:$0xf] %v737
                %v739 = vld [vmem:[%s703 + $0x44] sm:$0xf]
                %740 = vst [vmem:[%s704 + $0x44] sm:$0xf] %v739
                %v741 = vld [vmem:[%s703 + $0x48] sm:$0xf]
                %742 = vst [vmem:[%s704 + $0x48] sm:$0xf] %v741
                %v743 = vld [vmem:[%s703 + $0x4c] sm:$0xf]
                %744 = vst [vmem:[%s704 + $0x4c] sm:$0xf] %v743
                %v745 = vld [vmem:[%s703 + $0x50] sm:$0xf]
                %746 = vst [vmem:[%s704 + $0x50] sm:$0xf] %v745
                %v747 = vld [vmem:[%s703 + $0x54] sm:$0xf]
                %748 = vst [vmem:[%s704 + $0x54] sm:$0xf] %v747
                %v749 = vld [vmem:[%s703 + $0x58] sm:$0xf]
                %750 = vst [vmem:[%s704 + $0x58] sm:$0xf] %v749
                %v751 = vld [vmem:[%s703 + $0x5c] sm:$0xf]
                %752 = vst [vmem:[%s704 + $0x5c] sm:$0xf] %v751
                %v753 = vld [vmem:[%s703 + $0x60] sm:$0xf]
                %754 = vst [vmem:[%s704 + $0x60] sm:$0xf] %v753
                %v755 = vld [vmem:[%s703 + $0x64] sm:$0xf]
                %756 = vst [vmem:[%s704 + $0x64] sm:$0xf] %v755
                %s757 = sadd.s32 1, %s702
                %p758 = scmp.ge.s32.totalorder %s757, %s694
                %s759 = scalar_select %p758, 0, %s757
                %s760 = smul.u32 %s759, 104
                %s761 = smul.u32 %s759, 104
                %s762 = scalar_lea.vmem %s674, %s760 [#allocation4]
                %s763 = scalar_lea.vmem %s685, %s761
              $region57: #{tpu_custom_call.1} parent=51 // loop_footer
                %s699 = sadd.s32 %s697, 1
              $region58: #{tpu_custom_call.1} parent=51 // loop_footer_branch
                %696 = sbr.rel target = $region54
              $region59: #{tpu_custom_call.1} parent=51 // loop_exit
                _
              %s764 = sdiv.u32.pop %s681, 26
              %s765 = srem.u32.pop %s681, 26
              %s766 = smul.u32 %s764, 26
              %s767 = smul.u32 4, %s766
              %s768 = scalar_lea.vmem %s674, %s767 [#allocation4]
              %s769 = smul.u32 4, %s766
              %s770 = scalar_lea.vmem %s685, %s769
              // While loop
              $region60: #{tpu_custom_call.1} parent=51 // loop_pre_header
                _
              $region61: #{tpu_custom_call.1} parent=51 // loop_header
                %s772 = sphi 0, %s774
                %p773 = scmp.ge.s32.totalorder %s772, %s765
                %s777 = sphi 0, %s784
                %s778 = sphi %s768, %s787
                %s779 = sphi %s770, %s788
              $region62: #{tpu_custom_call.1} parent=51 // loop_header_branch
                %776 = sbr.rel (%p773) target = $region66
              $region63: #{tpu_custom_call.1} parent=51 // loop_body
                %v780 = vld [vmem:[%s778] sm:$0xf]
                %781 = vst [vmem:[%s779] sm:$0xf] %v780
                %s782 = sadd.s32 1, %s777
                %p783 = scmp.ge.s32.totalorder %s782, %s765
                %s784 = scalar_select %p783, 0, %s782
                %s785 = smul.u32 %s784, 4
                %s786 = smul.u32 %s784, 4
                %s787 = scalar_lea.vmem %s768, %s785 [#allocation4]
                %s788 = scalar_lea.vmem %s770, %s786
              $region64: #{tpu_custom_call.1} parent=51 // loop_footer
                %s774 = sadd.s32 %s772, 1
              $region65: #{tpu_custom_call.1} parent=51 // loop_footer_branch
                %771 = sbr.rel target = $region61
              $region66: #{tpu_custom_call.1} parent=51 // loop_exit
                _
            $region52: #{tpu_custom_call.1} parent=43 // pred_fallthru
              _
          $region44: #{tpu_custom_call.1} parent=39 // pred_fallthru
            _
          %887 = vnop
        $region40: #{tpu_custom_call.1} parent=31 // pred_fallthru
          _
      $region32: #{tpu_custom_call.1} parent=5 // pred_fallthru
        _
      %p888 = scmp.le.s32.totalorder 2, %s12
      // Predicated region
      $region85: #{tpu_custom_call.1} parent=5 // pred_check
        %p889 = pneg %p888
      $region86: #{tpu_custom_call.1} parent=5 // pred_check_branch
        %891 = sbr.rel (%p889) target = $region88
      $region87: #{tpu_custom_call.1} parent=5 // pred_region
        %s892 = ssub.s32 %s12, 2
        // Predicated region
        $region89: #{tpu_custom_call.1} parent=87 // pred_check
          %p893 = pneg %p109
        $region90: #{tpu_custom_call.1} parent=87 // pred_check_branch
          %895 = sbr.rel (%p893) target = $region92
        $region91: #{tpu_custom_call.1} parent=87 // pred_region
          %s896 = sand.u32 %s94, 1
          %s897 = sand.u32 %s94, 1
          %s898 = smul.addr %s897, 104
          %s899 = scalar_lea.vmem [#allocation4], %s898
        $region92: #{tpu_custom_call.1} parent=87 // pred_fallthru
          _
      $region88: #{tpu_custom_call.1} parent=5 // pred_fallthru
        _
    $region6: #{tpu_custom_call.1} parent=1 // loop_footer
      %s16 = sadd.s32 1, %s12
    $region7: #{tpu_custom_call.1} parent=1 // loop_footer_branch
      %11 = sbr.rel target = $region3
    $region8: #{tpu_custom_call.1} parent=1 // loop_exit
      _
    %900 = vsyncpa [#allocation3], 1
    %s901 = scalar_lea.sflag [#allocation3], 1
    %902 = vsyncpa %s901, 1

</llo_original>
